<compile_context>
chip_gen: v6e
topology: v6e:2x2x1
jax: 0.10.0
libtpu: 0.0.40
codegen_flags: <defaults>
</compile_context>

<pallas_src>
import functools

import jax
import jax.numpy as jnp
from jax.experimental import pallas as pl
from jax.experimental.pallas import tpu as pltpu


def _critic_kernel(x_ref, w1_ref, b1_ref, w2_ref, b2_ref, w3_ref, b3_ref, o_ref):
    # Activations arrive f32; feed the MXU bf16, accumulate in f32.
    x = x_ref[...].astype(jnp.bfloat16)                      # [TB, Sd+Ad]

    # fc1 + relu (single dot over the pre-concatenated input), fused bf16 cast.
    h1 = jnp.maximum(
        jnp.dot(x, w1_ref[...], preferred_element_type=jnp.float32) + b1_ref[...],
        0.0).astype(jnp.bfloat16)                            # [TB, 256]

    # fc2 + relu, fused bf16 cast (only the bf16 copy needs to persist).
    h2 = jnp.maximum(
        jnp.dot(h1, w2_ref[...], preferred_element_type=jnp.float32) + b2_ref[...],
        0.0).astype(jnp.bfloat16)                            # [TB, 256]

    # fc3 on the MXU (N=1): K-reduction is structural in the systolic array,
    # so this costs ~TB/8 extra pushes instead of competing XLU lane reduces.
    y = jnp.dot(h2, w3_ref[...], preferred_element_type=jnp.float32) + b3_ref[...]
    o_ref[...] = y.astype(o_ref.dtype)                       # [TB, 1]


def _round_up(n, m):
    return (n + m - 1) // m * m


def prepare_critic_params(params):
    """One-time weight prep: bf16 MXU weights, f32 row-vector biases.

    Call once; the result is what critic_forward expects.  Keeping this out of
    the per-call path removes the slice/convert ops (and the W2 HBM
    read+write) that otherwise serialize ahead of every pallas_call.
    """
    w1, b1, w2, b2, w3, b3 = params
    return (
        w1.astype(jnp.bfloat16),                   # [Sd+Ad, 256]
        jnp.reshape(b1, (1, -1)).astype(jnp.float32),
        w2.astype(jnp.bfloat16),                   # [256, 256]
        jnp.reshape(b2, (1, -1)).astype(jnp.float32),
        w3.reshape(-1, 1).astype(jnp.bfloat16),    # [256, 1]
        jnp.reshape(b3, (1, 1)).astype(jnp.float32),
    )


@functools.partial(jax.jit, static_argnames=("max_tile",))
def critic_forward(state, action, prepared_params, *, max_tile=4096):
    """state: [1, B, state_dim] (or [B, state_dim]); action: [B, action_dim]."""
    if state.ndim == 3:
        state = jnp.squeeze(state, axis=0)         # state.squeeze(0)

    B = state.shape[0]
    w1, b1, w2, b2, w3, b3 = prepared_params
    in_dim = w1.shape[0]                           # state_dim + action_dim

    # Pre-concatenate the activations (tiny HBM traffic) so fc1 is one dot.
    x = jnp.concatenate([state, action], axis=1).astype(jnp.float32)

    # Batch tiling:
    #   * B >  max_tile : fixed max_tile rows per grid step (weights stay
    #     VMEM-resident across steps via constant index_maps).
    #   * 1024 <= B <= max_tile : split into two grid steps so v7x's second
    #     TensorCore gets work under dimension_semantics=("parallel",).
    #   * small B       : single tile, rounded up to the sublane multiple.
    if B > max_tile:
        TB = max_tile
    elif B >= 1024:
        TB = _round_up(pl.cdiv(B, 2), 8)
    else:
        TB = _round_up(max(B, 1), 8)
    B_pad = _round_up(B, TB)
    if B_pad != B:
        x = jnp.pad(x, ((0, B_pad - B), (0, 0)))

    resident = lambda arr: pl.BlockSpec(arr.shape, lambda i: (0, 0))

    out = pl.pallas_call(
        _critic_kernel,
        out_shape=jax.ShapeDtypeStruct((B_pad, 1), jnp.float32),
        grid=(B_pad // TB,),
        in_specs=[
            pl.BlockSpec((TB, in_dim), lambda i: (i, 0)),   # activation tile
            resident(w1), resident(b1),
            resident(w2), resident(b2),
            resident(w3), resident(b3),
        ],
        out_specs=pl.BlockSpec((TB, 1), lambda i: (i, 0)),
        compiler_params=pltpu.CompilerParams(
            dimension_semantics=("parallel",),     # megacore split on v7x
            vmem_limit_bytes=48 * 1024 * 1024,     # explicit: > scoped default,
        ),                                         # < v7x 64 MiB physical
    )(x, w1, b1, w2, b2, w3, b3)

    return out[:B]


def init_critic_params(key, state_dim, action_dim, hidden=256):
    """Deterministic init matching PyTorch Linear shapes (stored transposed)."""
    def linear(key, fan_in, fan_out):
        kw, kb = jax.random.split(key)
        bound = 1.0 / jnp.sqrt(fan_in)
        # PyTorch: weight [out, in]; we store [in, out] for y = x @ W + b.
        w = jax.random.uniform(kw, (fan_in, fan_out), jnp.float32, -bound, bound)
        b = jax.random.uniform(kb, (1, fan_out), jnp.float32, -bound, bound)
        return w, b

    k1, k2, k3 = jax.random.split(key, 3)
    w1, b1 = linear(k1, state_dim + action_dim, hidden)
    w2, b2 = linear(k2, hidden, hidden)
    w3, b3 = linear(k3, hidden, 1)
    return (w1, b1, w2, b2, w3, b3)


def critic_reference(state, action, params):
    """Pure-JAX f32 reference (mirrors the PyTorch module exactly)."""
    if state.ndim == 3:
        state = jnp.squeeze(state, axis=0)
    x = jnp.concatenate([state, action], axis=1)
    w1, b1, w2, b2, w3, b3 = params
    h = jnp.maximum(x @ w1 + b1, 0.0)
    h = jnp.maximum(h @ w2 + b2, 0.0)
    return h @ w3 + b3


if __name__ == "__main__":
    key = jax.random.PRNGKey(0)
    k_state, k_action, k_params = jax.random.split(key, 3)

    batch, state_dim, action_dim = 8, 16, 4
    state = jax.random.normal(k_state, (1, batch, state_dim), jnp.float32)
    action = jax.random.normal(k_action, (batch, action_dim), jnp.float32)

    params = init_critic_params(k_params, state_dim, action_dim)
    prepared = prepare_critic_params(params)   # one-time; hoisted off hot path

    y = critic_forward(state, action, prepared)
    y = jax.block_until_ready(y)

    y_ref = critic_reference(state, action, params)
    assert y.shape == (batch, 1)
    # bf16 MXU operands with f32 accumulation: tolerance relaxed accordingly.
    assert jnp.allclose(y, y_ref, atol=2e-2, rtol=2e-2)

    print("KERNEL_OK")
</pallas_src>

<mosaic_0001>
module attributes {stable_mosaic.version = 11 : i64} {
  func.func @_critic_kernel(%arg0: i32, %arg1: memref<8x20xf32, #tpu.memory_space<vmem>>, %arg2: memref<20x256xbf16, #tpu.memory_space<vmem>>, %arg3: memref<1x256xf32, #tpu.memory_space<vmem>>, %arg4: memref<256x256xbf16, #tpu.memory_space<vmem>>, %arg5: memref<1x256xf32, #tpu.memory_space<vmem>>, %arg6: memref<256x1xbf16, #tpu.memory_space<vmem>>, %arg7: memref<1x1xf32, #tpu.memory_space<vmem>>, %arg8: memref<8x1xf32, #tpu.memory_space<vmem>>) attributes {dimension_semantics = [#tpu.dimension_semantics<parallel>], iteration_bounds = array<i64: 1>, scalar_prefetch = 0 : i64, scratch_operands = 0 : i64, tpu.core_type = #tpu.core_type<tc>, window_params = [{transform_indices = @transform_0, window_bounds = array<i64: 8, 20>}, {pipeline_mode = #tpu.pipeline_mode<synchronous>, transform_indices = @transform_1, window_bounds = array<i64: 20, 256>}, {pipeline_mode = #tpu.pipeline_mode<synchronous>, transform_indices = @transform_2, window_bounds = array<i64: 1, 256>}, {pipeline_mode = #tpu.pipeline_mode<synchronous>, transform_indices = @transform_3, window_bounds = array<i64: 256, 256>}, {pipeline_mode = #tpu.pipeline_mode<synchronous>, transform_indices = @transform_4, window_bounds = array<i64: 1, 256>}, {pipeline_mode = #tpu.pipeline_mode<synchronous>, transform_indices = @transform_5, window_bounds = array<i64: 256, 1>}, {pipeline_mode = #tpu.pipeline_mode<synchronous>, transform_indices = @transform_6, window_bounds = array<i64: 1, 1>}, {transform_indices = @transform_7, window_bounds = array<i64: 8, 1>}]} {
    %c0 = arith.constant 0 : index
    %c0_0 = arith.constant 0 : index
    %0 = vector.load %arg1[%c0, %c0_0] : memref<8x20xf32, #tpu.memory_space<vmem>>, vector<8x20xf32>
    %1 = arith.truncf %0 : vector<8x20xf32> to vector<8x20xbf16>
    %c0_1 = arith.constant 0 : index
    %c0_2 = arith.constant 0 : index
    %2 = vector.load %arg2[%c0_1, %c0_2] : memref<20x256xbf16, #tpu.memory_space<vmem>>, vector<20x256xbf16>
    %cst = arith.constant dense<0.000000e+00> : vector<8x256xf32>
    %3 = tpu.matmul %1, %2, %cst {dimension_numbers = #tpu.dot_dimension_numbers<[1], [0], [0], [1], [0, 0, 1, 1], [], []>} : vector<8x20xbf16>, vector<20x256xbf16>, vector<8x256xf32> -> vector<8x256xf32>
    %c0_3 = arith.constant 0 : index
    %c0_4 = arith.constant 0 : index
    %4 = vector.load %arg3[%c0_3, %c0_4] : memref<1x256xf32, #tpu.memory_space<vmem>>, vector<1x256xf32>
    %5 = vector.broadcast %4 : vector<1x256xf32> to vector<8x256xf32>
    %6 = arith.addf %3, %5 : vector<8x256xf32>
    %cst_5 = arith.constant 0.000000e+00 : f32
    %7 = vector.broadcast %cst_5 : f32 to vector<8x256xf32>
    %8 = arith.maximumf %6, %7 : vector<8x256xf32>
    %9 = arith.truncf %8 : vector<8x256xf32> to vector<8x256xbf16>
    %c0_6 = arith.constant 0 : index
    %c0_7 = arith.constant 0 : index
    %10 = vector.load %arg4[%c0_6, %c0_7] : memref<256x256xbf16, #tpu.memory_space<vmem>>, vector<256x256xbf16>
    %cst_8 = arith.constant dense<0.000000e+00> : vector<8x256xf32>
    %11 = tpu.matmul %9, %10, %cst_8 {dimension_numbers = #tpu.dot_dimension_numbers<[1], [0], [0], [1], [0, 0, 1, 1], [], []>} : vector<8x256xbf16>, vector<256x256xbf16>, vector<8x256xf32> -> vector<8x256xf32>
    %c0_9 = arith.constant 0 : index
    %c0_10 = arith.constant 0 : index
    %12 = vector.load %arg5[%c0_9, %c0_10] : memref<1x256xf32, #tpu.memory_space<vmem>>, vector<1x256xf32>
    %13 = vector.broadcast %12 : vector<1x256xf32> to vector<8x256xf32>
    %14 = arith.addf %11, %13 : vector<8x256xf32>
    %cst_11 = arith.constant 0.000000e+00 : f32
    %15 = vector.broadcast %cst_11 : f32 to vector<8x256xf32>
    %16 = arith.maximumf %14, %15 : vector<8x256xf32>
    %17 = arith.truncf %16 : vector<8x256xf32> to vector<8x256xbf16>
    %c0_12 = arith.constant 0 : index
    %c0_13 = arith.constant 0 : index
    %18 = vector.load %arg6[%c0_12, %c0_13] : memref<256x1xbf16, #tpu.memory_space<vmem>>, vector<256x1xbf16>
    %cst_14 = arith.constant dense<0.000000e+00> : vector<8x1xf32>
    %19 = tpu.matmul %17, %18, %cst_14 {dimension_numbers = #tpu.dot_dimension_numbers<[1], [0], [0], [1], [0, 0, 1, 1], [], []>} : vector<8x256xbf16>, vector<256x1xbf16>, vector<8x1xf32> -> vector<8x1xf32>
    %c0_15 = arith.constant 0 : index
    %c0_16 = arith.constant 0 : index
    %20 = vector.load %arg7[%c0_15, %c0_16] : memref<1x1xf32, #tpu.memory_space<vmem>>, vector<1x1xf32>
    %21 = vector.broadcast %20 : vector<1x1xf32> to vector<8x1xf32>
    %22 = arith.addf %19, %21 : vector<8x1xf32>
    %c0_17 = arith.constant 0 : index
    %c0_18 = arith.constant 0 : index
    %23 = vector.load %arg8[%c0_17, %c0_18] : memref<8x1xf32, #tpu.memory_space<vmem>>, vector<8x1xf32>
    tpu.vector_store %arg8[%c0_17, %c0_18], %22 {strides = array<i32>} : memref<8x1xf32, #tpu.memory_space<vmem>>, vector<8x1xf32>,
    return
  }
  func.func @transform_0(%arg0: i32) -> (i32, i32) {
    %c0_i32 = arith.constant 0 : i32
    %c0_i32_0 = arith.constant 0 : i32
    return %arg0, %c0_i32 : i32, i32
  }
  func.func @transform_1(%arg0: i32) -> (i32, i32) {
    %c0_i32 = arith.constant 0 : i32
    %c0_i32_0 = arith.constant 0 : i32
    %c0_i32_1 = arith.constant 0 : i32
    return %c0_i32, %c0_i32_0 : i32, i32
  }
  func.func @transform_2(%arg0: i32) -> (i32, i32) {
    %c0_i32 = arith.constant 0 : i32
    %c0_i32_0 = arith.constant 0 : i32
    %c0_i32_1 = arith.constant 0 : i32
    return %c0_i32, %c0_i32_0 : i32, i32
  }
  func.func @transform_3(%arg0: i32) -> (i32, i32) {
    %c0_i32 = arith.constant 0 : i32
    %c0_i32_0 = arith.constant 0 : i32
    %c0_i32_1 = arith.constant 0 : i32
    return %c0_i32, %c0_i32_0 : i32, i32
  }
  func.func @transform_4(%arg0: i32) -> (i32, i32) {
    %c0_i32 = arith.constant 0 : i32
    %c0_i32_0 = arith.constant 0 : i32
    %c0_i32_1 = arith.constant 0 : i32
    return %c0_i32, %c0_i32_0 : i32, i32
  }
  func.func @transform_5(%arg0: i32) -> (i32, i32) {
    %c0_i32 = arith.constant 0 : i32
    %c0_i32_0 = arith.constant 0 : i32
    %c0_i32_1 = arith.constant 0 : i32
    return %c0_i32, %c0_i32_0 : i32, i32
  }
  func.func @transform_6(%arg0: i32) -> (i32, i32) {
    %c0_i32 = arith.constant 0 : i32
    %c0_i32_0 = arith.constant 0 : i32
    %c0_i32_1 = arith.constant 0 : i32
    return %c0_i32, %c0_i32_0 : i32, i32
  }
  func.func @transform_7(%arg0: i32) -> (i32, i32) {
    %c0_i32 = arith.constant 0 : i32
    %c0_i32_0 = arith.constant 0 : i32
    return %arg0, %c0_i32 : i32, i32
  }
}

</mosaic_0001>

<llo_original>
// kernel: critic_forward.1
$region0: #{critic_forward.1}
  #allocation0 [shape = 'u32[]', space=smem, size = 0x4, offset = 0x4, fixed_abs, tag = 'smem constant byte address 0x4 - core index']
  #allocation1 [shape = 'u32[144,128]{1,0:T(1,128)}', space=vmem, size = 0x12000, scoped, tag = 'internal scratch']
  #allocation2 [shape = 'f32[1,1]{1,0:T(1,128)S(1)}', space=vmem, size = 0x200, scoped, tag = 'scoped memory for critic_forward.1']
  %s0 = inlined_call_operand.vmem [shape: f32[8,20], index: 0, kind: input, shape index: {}]
  %s1 = inlined_call_operand.vmem [shape: bf16[20,256], index: 1, kind: input, shape index: {}]
  %s2 = inlined_call_operand.vmem [shape: f32[1,256], index: 2, kind: input, shape index: {}]
  %s3 = inlined_call_operand.hbm [shape: bf16[256,256], index: 3, kind: input, shape index: {}]
  %s4 = inlined_call_operand.vmem [shape: f32[1,256], index: 4, kind: input, shape index: {}]
  %s5 = inlined_call_operand.vmem [shape: bf16[256,1], index: 5, kind: input, shape index: {}]
  %s6 = inlined_call_operand.<no memory space> [shape: f32[1,1], index: 6, kind: input, shape index: {}]
  %s7 = inlined_call_operand.vmem [shape: f32[8,1], index: 7, kind: output, shape index: {}]
  %s8 = sld [smem:[#allocation0]]
  $region42: #{critic_forward.1} parent=0
    _
  %s10 = ssub.s32 1, %s8
  %s11 = scalar_select 0, %s10, %s8
  %v12 = vstv %s6
  %13 = vst [vmem:[#allocation2] sm:$0x1] %v12
  $region1: #{critic_forward.1} parent=0
    #allocation3 [shape = 'u8[131072]{0}', space=vmem, size = 0x20000, scoped, tag = 'input window, operand 3, single buffered']
    #allocation4 [shape = 's32[1]{0}', space=sflag, size = 0x4, scoped, tag = 'scoped memory for critic_forward.1']
    %14 = vsyncpa [#allocation4], 0
    // Predicated region
    $region2: #{critic_forward.1} parent=1 // pred_check
      _
    $region3: #{critic_forward.1} parent=1 // pred_check_branch
      %16 = sbr.rel (0) target = $region5
    $region4: #{critic_forward.1} parent=1 // pred_region
      _
    $region5: #{critic_forward.1} parent=1 // pred_fallthru
      _
    // Predicated region
    $region6: #{critic_forward.1} parent=1 // pred_check
      _
    $region7: #{critic_forward.1} parent=1 // pred_check_branch
      %18 = sbr.rel (0) target = $region9
    $region8: #{critic_forward.1} parent=1 // pred_region
      _
    $region9: #{critic_forward.1} parent=1 // pred_fallthru
      _
    // Predicated region
    $region10: #{critic_forward.1} parent=1 // pred_check
      _
    $region11: #{critic_forward.1} parent=1 // pred_check_branch
      %20 = sbr.rel (0) target = $region13
    $region12: #{critic_forward.1} parent=1 // pred_region
      _
    $region13: #{critic_forward.1} parent=1 // pred_fallthru
      _
    // Predicated region
    $region14: #{critic_forward.1} parent=1 // pred_check
      _
    $region15: #{critic_forward.1} parent=1 // pred_check_branch
      %22 = sbr.rel (0) target = $region17
    $region16: #{critic_forward.1} parent=1 // pred_region
      %s24 = ssub.s32 4096, 4096
      %25 = vsyncadd [#allocation4], %s24
      %s26 = sshll.u32 [#allocation3], 4
      %s27 = int_to_ptr.vmem [resolvable:$true] %s26
      %32 = dma.hbm_to_vmem [thread:$0]  %s3, 4096, %s27, [#allocation4], 128, 128, 8
    $region17: #{critic_forward.1} parent=1 // pred_fallthru
      _
    // Predicated region
    $region18: #{critic_forward.1} parent=1 // pred_check
      _
    $region19: #{critic_forward.1} parent=1 // pred_check_branch
      %34 = sbr.rel (0) target = $region21
    $region20: #{critic_forward.1} parent=1 // pred_region
      _
    $region21: #{critic_forward.1} parent=1 // pred_fallthru
      _
    // Predicated region
    $region22: #{critic_forward.1} parent=1 // pred_check
      _
    $region23: #{critic_forward.1} parent=1 // pred_check_branch
      %36 = sbr.rel (0) target = $region25
    $region24: #{critic_forward.1} parent=1 // pred_region
      _
    $region25: #{critic_forward.1} parent=1 // pred_fallthru
      _
    // Predicated region
    $region26: #{critic_forward.1} parent=1 // pred_check
      _
    $region27: #{critic_forward.1} parent=1 // pred_check_branch
      %38 = sbr.rel (0) target = $region29
    $region28: #{critic_forward.1} parent=1 // pred_region
      _
    $region29: #{critic_forward.1} parent=1 // pred_fallthru
      _
    // Predicated region
    $region30: #{critic_forward.1} parent=1 // pred_check
      _
    $region31: #{critic_forward.1} parent=1 // pred_check_branch
      %40 = sbr.rel (0) target = $region33
    $region32: #{critic_forward.1} parent=1 // pred_region
      %41 = dma.done [#allocation4], 4096
    $region33: #{critic_forward.1} parent=1 // pred_fallthru
      _
    %v43 = vld [vmem:[%s0] sm:$0xff]
    %v44 = vpack.c.bf16 %v43, %v43
    %v45 = vld [vmem:[%s1] sm:$0xff]
    %v46 = vld [vmem:[%s1 + $0x8] sm:$0xff]
    %v47 = vld [vmem:[%s1 + $0x10] sm:$0x33]
    %v48 = vld [vmem:[%s2] sm:$0x3]
    %v50 = vlaneseq
    %v51 = vshrl.u32 %v50, 7
    %v52 = vsub.s32 0, %v51
    %v53 = vrot.slane %v48, %v52
    %v54 = vlaneseq
    %v55 = vshrl.u32 %v54, 7
    %v56 = vsub.s32 1, %v55
    %v57 = vrot.slane %v48, %v56
    %v63 = vunpack.c.l.b16 %v45
    %v64 = vunpack.c.h.b16 %v45
    %v65 = vunpack.c.l.b16 %v46
    %v66 = vunpack.c.h.b16 %v46
    %v67 = vunpack.c.l.b16 %v47
    %v68 = vunpack.c.h.b16 %v47
    %v69 = vpack.c.b16 %v65, %v63
    %v70 = vpack.c.b16 %v66, %v64
    %v71 = vpack.c.b16 %v67, %v67
    %v72 = vpack.c.b16 %v68, %v68
    %vm75 = vcmask 162816
    %v77 = vsel %vm75, %v44, 0
    %vm79 = vcmask 1041408
    %v81 = vsel %vm79, %v71, 0
    %v84 = vsel %vm79, %v72, 0
    %86 = vmatprep.subr.bf16.mxu0 0
    %87 = vmatpush1.bf16.msra.mxu0 0
    %88 = vmatprep.subr.bf16.mxu0 0
    %89 = vmatpush1.bf16.msra.mxu0 0
    %90 = vmatprep.subr.bf16.mxu0 0
    %91 = vmatpush1.bf16.msra.mxu0 0
    %92 = vmatprep.subr.bf16.mxu0 0
    %93 = vmatpush1.bf16.msra.mxu0 0
    %94 = vmatprep.subr.bf16.mxu0 0
    %95 = vmatpush1.bf16.msra.mxu0 0
    %96 = vmatprep.subr.bf16.mxu0 0
    %97 = vmatpush1.bf16.msra.mxu0 0
    %98 = vmatprep.subr.bf16.mxu0 %v84
    %99 = vmatpush1.bf16.msra.mxu0 %v81
    %100 = vmatprep.subr.bf16.mxu0 %v70
    %101 = vmatpush1.bf16.msra.mxu0 %v69
    %102 = vmatprep.subr.bf16.mxu0 0
    %103 = vmatpush2.bf16.msra.mxu0 0
    %104 = vmatprep.subr.bf16.mxu0 0
    %105 = vmatpush2.bf16.msra.mxu0 0
    %106 = vmatprep.subr.bf16.mxu0 0
    %107 = vmatpush2.bf16.msra.mxu0 0
    %108 = vmatprep.subr.bf16.mxu0 0
    %109 = vmatpush2.bf16.msra.mxu0 0
    %110 = vmatprep.subr.bf16.mxu0 0
    %111 = vmatpush2.bf16.msra.mxu0 0
    %112 = vmatprep.subr.bf16.mxu0 0
    %113 = vmatpush2.bf16.msra.mxu0 0
    %114 = vmatprep.subr.bf16.mxu0 0
    %115 = vmatpush2.bf16.msra.mxu0 0
    %116 = vmatprep.subr.bf16.mxu0 0
    %117 = vmatpush2.bf16.msra.mxu0 0
    %118 = vmatprep.mubr.bf16.mxu0 0
    %119 = vmatmul.mubr.bf16.gmra.mxu0 %v77
    %v120 = vpop.f32.mrf.mxu0
    %v121 = vadd.f32 %v53, %v120
    %v122 = vpop.f32.mrf.mxu0
    %v123 = vadd.f32 %v57, %v122
    %v124 = vpop.f32.mrf.mxu0
    %v125 = vpop.f32.mrf.mxu0
    %126 = vdwg.mxu0
    %v127 = vmax.f32 %v121, 0.0
    %v128 = vmax.f32 %v123, 0.0
    %v129 = vpack.c.bf16 %v127, %v127
    %v130 = vpack.c.bf16 %v128, %v128
    %v131 = vld [vmem:[#allocation3] sm:$0xff]
    %v132 = vld [vmem:[#allocation3 + $0x8] sm:$0xff]
    %v133 = vld [vmem:[#allocation3 + $0x10] sm:$0xff]
    %v134 = vld [vmem:[#allocation3 + $0x18] sm:$0xff]
    %v135 = vld [vmem:[#allocation3 + $0x20] sm:$0xff]
    %v136 = vld [vmem:[#allocation3 + $0x28] sm:$0xff]
    %v137 = vld [vmem:[#allocation3 + $0x30] sm:$0xff]
    %v138 = vld [vmem:[#allocation3 + $0x38] sm:$0xff]
    %v139 = vld [vmem:[#allocation3 + $0x40] sm:$0xff]
    %v140 = vld [vmem:[#allocation3 + $0x48] sm:$0xff]
    %v141 = vld [vmem:[#allocation3 + $0x50] sm:$0xff]
    %v142 = vld [vmem:[#allocation3 + $0x58] sm:$0xff]
    %v143 = vld [vmem:[#allocation3 + $0x60] sm:$0xff]
    %v144 = vld [vmem:[#allocation3 + $0x68] sm:$0xff]
    %v145 = vld [vmem:[#allocation3 + $0x70] sm:$0xff]
    %v146 = vld [vmem:[#allocation3 + $0x78] sm:$0xff]
    %v147 = vld [vmem:[#allocation3 + $0x80] sm:$0xff]
    %v148 = vld [vmem:[#allocation3 + $0x88] sm:$0xff]
    %v149 = vld [vmem:[#allocation3 + $0x90] sm:$0xff]
    %v150 = vld [vmem:[#allocation3 + $0x98] sm:$0xff]
    %v151 = vld [vmem:[#allocation3 + $0xa0] sm:$0xff]
    %v152 = vld [vmem:[#allocation3 + $0xa8] sm:$0xff]
    %v153 = vld [vmem:[#allocation3 + $0xb0] sm:$0xff]
    %v154 = vld [vmem:[#allocation3 + $0xb8] sm:$0xff]
    %v155 = vld [vmem:[#allocation3 + $0xc0] sm:$0xff]
    %v156 = vld [vmem:[#allocation3 + $0xc8] sm:$0xff]
    %v157 = vld [vmem:[#allocation3 + $0xd0] sm:$0xff]
    %v158 = vld [vmem:[#allocation3 + $0xd8] sm:$0xff]
    %v159 = vld [vmem:[#allocation3 + $0xe0] sm:$0xff]
    %v160 = vld [vmem:[#allocation3 + $0xe8] sm:$0xff]
    %v161 = vld [vmem:[#allocation3 + $0xf0] sm:$0xff]
    %v162 = vld [vmem:[#allocation3 + $0xf8] sm:$0xff]
    %v163 = vld [vmem:[%s4] sm:$0x3]
    %v165 = vlaneseq
    %v166 = vshrl.u32 %v165, 7
    %v167 = vsub.s32 0, %v166
    %v168 = vrot.slane %v163, %v167
    %v169 = vlaneseq
    %v170 = vshrl.u32 %v169, 7
    %v171 = vsub.s32 1, %v170
    %v172 = vrot.slane %v163, %v171
    %v207 = vunpack.c.l.b16 %v131
    %v208 = vunpack.c.h.b16 %v131
    %v209 = vunpack.c.l.b16 %v132
    %v210 = vunpack.c.h.b16 %v132
    %v211 = vunpack.c.l.b16 %v133
    %v212 = vunpack.c.h.b16 %v133
    %v213 = vunpack.c.l.b16 %v134
    %v214 = vunpack.c.h.b16 %v134
    %v215 = vunpack.c.l.b16 %v135
    %v216 = vunpack.c.h.b16 %v135
    %v217 = vunpack.c.l.b16 %v136
    %v218 = vunpack.c.h.b16 %v136
    %v219 = vunpack.c.l.b16 %v137
    %v220 = vunpack.c.h.b16 %v137
    %v221 = vunpack.c.l.b16 %v138
    %v222 = vunpack.c.h.b16 %v138
    %v223 = vunpack.c.l.b16 %v139
    %v224 = vunpack.c.h.b16 %v139
    %v225 = vunpack.c.l.b16 %v140
    %v226 = vunpack.c.h.b16 %v140
    %v227 = vunpack.c.l.b16 %v141
    %v228 = vunpack.c.h.b16 %v141
    %v229 = vunpack.c.l.b16 %v142
    %v230 = vunpack.c.h.b16 %v142
    %v231 = vunpack.c.l.b16 %v143
    %v232 = vunpack.c.h.b16 %v143
    %v233 = vunpack.c.l.b16 %v144
    %v234 = vunpack.c.h.b16 %v144
    %v235 = vunpack.c.l.b16 %v145
    %v236 = vunpack.c.h.b16 %v145
    %v237 = vunpack.c.l.b16 %v146
    %v238 = vunpack.c.h.b16 %v146
    %v239 = vunpack.c.l.b16 %v147
    %v240 = vunpack.c.h.b16 %v147
    %v241 = vunpack.c.l.b16 %v148
    %v242 = vunpack.c.h.b16 %v148
    %v243 = vunpack.c.l.b16 %v149
    %v244 = vunpack.c.h.b16 %v149
    %v245 = vunpack.c.l.b16 %v150
    %v246 = vunpack.c.h.b16 %v150
    %v247 = vunpack.c.l.b16 %v151
    %v248 = vunpack.c.h.b16 %v151
    %v249 = vunpack.c.l.b16 %v152
    %v250 = vunpack.c.h.b16 %v152
    %v251 = vunpack.c.l.b16 %v153
    %v252 = vunpack.c.h.b16 %v153
    %v253 = vunpack.c.l.b16 %v154
    %v254 = vunpack.c.h.b16 %v154
    %v255 = vunpack.c.l.b16 %v155
    %v256 = vunpack.c.h.b16 %v155
    %v257 = vunpack.c.l.b16 %v156
    %v258 = vunpack.c.h.b16 %v156
    %v259 = vunpack.c.l.b16 %v157
    %v260 = vunpack.c.h.b16 %v157
    %v261 = vunpack.c.l.b16 %v158
    %v262 = vunpack.c.h.b16 %v158
    %v263 = vunpack.c.l.b16 %v159
    %v264 = vunpack.c.h.b16 %v159
    %v265 = vunpack.c.l.b16 %v160
    %v266 = vunpack.c.h.b16 %v160
    %v267 = vunpack.c.l.b16 %v161
    %v268 = vunpack.c.h.b16 %v161
    %v269 = vunpack.c.l.b16 %v162
    %v270 = vunpack.c.h.b16 %v162
    %v271 = vpack.c.b16 %v209, %v207
    %v272 = vpack.c.b16 %v210, %v208
    %v273 = vpack.c.b16 %v213, %v211
    %v274 = vpack.c.b16 %v214, %v212
    %v275 = vpack.c.b16 %v217, %v215
    %v276 = vpack.c.b16 %v218, %v216
    %v277 = vpack.c.b16 %v221, %v219
    %v278 = vpack.c.b16 %v222, %v220
    %v279 = vpack.c.b16 %v225, %v223
    %v280 = vpack.c.b16 %v226, %v224
    %v281 = vpack.c.b16 %v229, %v227
    %v282 = vpack.c.b16 %v230, %v228
    %v283 = vpack.c.b16 %v233, %v231
    %v284 = vpack.c.b16 %v234, %v232
    %v285 = vpack.c.b16 %v237, %v235
    %v286 = vpack.c.b16 %v238, %v236
    %v287 = vpack.c.b16 %v241, %v239
    %v288 = vpack.c.b16 %v242, %v240
    %v289 = vpack.c.b16 %v245, %v243
    %v290 = vpack.c.b16 %v246, %v244
    %v291 = vpack.c.b16 %v249, %v247
    %v292 = vpack.c.b16 %v250, %v248
    %v293 = vpack.c.b16 %v253, %v251
    %v294 = vpack.c.b16 %v254, %v252
    %v295 = vpack.c.b16 %v257, %v255
    %v296 = vpack.c.b16 %v258, %v256
    %v297 = vpack.c.b16 %v261, %v259
    %v298 = vpack.c.b16 %v262, %v260
    %v299 = vpack.c.b16 %v265, %v263
    %v300 = vpack.c.b16 %v266, %v264
    %v301 = vpack.c.b16 %v269, %v267
    %v302 = vpack.c.b16 %v270, %v268
    %335 = vmatprep.subr.bf16.mxu0 %v286
    %336 = vmatpush1.bf16.msra.mxu0 %v285
    %337 = vmatprep.subr.bf16.mxu0 %v284
    %338 = vmatpush1.bf16.msra.mxu0 %v283
    %339 = vmatprep.subr.bf16.mxu0 %v282
    %340 = vmatpush1.bf16.msra.mxu0 %v281
    %341 = vmatprep.subr.bf16.mxu0 %v280
    %342 = vmatpush1.bf16.msra.mxu0 %v279
    %343 = vmatprep.subr.bf16.mxu0 %v278
    %344 = vmatpush1.bf16.msra.mxu0 %v277
    %345 = vmatprep.subr.bf16.mxu0 %v276
    %346 = vmatpush1.bf16.msra.mxu0 %v275
    %347 = vmatprep.subr.bf16.mxu0 %v274
    %348 = vmatpush1.bf16.msra.mxu0 %v273
    %349 = vmatprep.subr.bf16.mxu0 %v272
    %350 = vmatpush1.bf16.msra.mxu0 %v271
    %351 = vmatprep.subr.bf16.mxu0 %v302
    %352 = vmatpush2.bf16.msra.mxu0 %v301
    %353 = vmatprep.subr.bf16.mxu0 %v300
    %354 = vmatpush2.bf16.msra.mxu0 %v299
    %355 = vmatprep.subr.bf16.mxu0 %v298
    %356 = vmatpush2.bf16.msra.mxu0 %v297
    %357 = vmatprep.subr.bf16.mxu0 %v296
    %358 = vmatpush2.bf16.msra.mxu0 %v295
    %359 = vmatprep.subr.bf16.mxu0 %v294
    %360 = vmatpush2.bf16.msra.mxu0 %v293
    %361 = vmatprep.subr.bf16.mxu0 %v292
    %362 = vmatpush2.bf16.msra.mxu0 %v291
    %363 = vmatprep.subr.bf16.mxu0 %v290
    %364 = vmatpush2.bf16.msra.mxu0 %v289
    %365 = vmatprep.subr.bf16.mxu0 %v288
    %366 = vmatpush2.bf16.msra.mxu0 %v287
    %367 = vmatprep.mubr.bf16.mxu0 %v130
    %368 = vmatmul.mubr.bf16.gmra.mxu0 %v129
    %v369 = vpop.f32.mrf.mxu0
    %v370 = vadd.f32 %v168, %v369
    %v371 = vpop.f32.mrf.mxu0
    %v372 = vadd.f32 %v172, %v371
    %v373 = vpop.f32.mrf.mxu0
    %v374 = vpop.f32.mrf.mxu0
    %375 = vdwg.mxu0
    %v376 = vmax.f32 %v370, 0.0
    %v377 = vmax.f32 %v372, 0.0
    %v378 = vpack.c.bf16 %v376, %v376
    %v379 = vpack.c.bf16 %v377, %v377
    %v380 = vld [vmem:[%s5] sm:$0xf]
    %v381 = vld [vmem:[%s5 + $0x4] sm:$0xf]
    %v382 = vld [vmem:[%s5 + $0x8] sm:$0xf]
    %v383 = vld [vmem:[%s5 + $0xc] sm:$0xf]
    %v384 = vld [vmem:[%s5 + $0x10] sm:$0xf]
    %v385 = vld [vmem:[%s5 + $0x14] sm:$0xf]
    %v386 = vld [vmem:[%s5 + $0x18] sm:$0xf]
    %v387 = vld [vmem:[%s5 + $0x1c] sm:$0xf]
    %v388 = vld [vmem:[%s5 + $0x20] sm:$0xf]
    %v389 = vld [vmem:[%s5 + $0x24] sm:$0xf]
    %v390 = vld [vmem:[%s5 + $0x28] sm:$0xf]
    %v391 = vld [vmem:[%s5 + $0x2c] sm:$0xf]
    %v392 = vld [vmem:[%s5 + $0x30] sm:$0xf]
    %v393 = vld [vmem:[%s5 + $0x34] sm:$0xf]
    %v394 = vld [vmem:[%s5 + $0x38] sm:$0xf]
    %v395 = vld [vmem:[%s5 + $0x3c] sm:$0xf]
    %v396 = vld [vmem:[%s5 + $0x40] sm:$0xf]
    %v397 = vld [vmem:[%s5 + $0x44] sm:$0xf]
    %v398 = vld [vmem:[%s5 + $0x48] sm:$0xf]
    %v399 = vld [vmem:[%s5 + $0x4c] sm:$0xf]
    %v400 = vld [vmem:[%s5 + $0x50] sm:$0xf]
    %v401 = vld [vmem:[%s5 + $0x54] sm:$0xf]
    %v402 = vld [vmem:[%s5 + $0x58] sm:$0xf]
    %v403 = vld [vmem:[%s5 + $0x5c] sm:$0xf]
    %v404 = vld [vmem:[%s5 + $0x60] sm:$0xf]
    %v405 = vld [vmem:[%s5 + $0x64] sm:$0xf]
    %v406 = vld [vmem:[%s5 + $0x68] sm:$0xf]
    %v407 = vld [vmem:[%s5 + $0x6c] sm:$0xf]
    %v408 = vld [vmem:[%s5 + $0x70] sm:$0xf]
    %v409 = vld [vmem:[%s5 + $0x74] sm:$0xf]
    %v410 = vld [vmem:[%s5 + $0x78] sm:$0xf]
    %v411 = vld [vmem:[%s5 + $0x7c] sm:$0xf]
    %v412 = vld [vmem:[#allocation2] sm:$0x1]
    %v414 = vlaneseq
    %v415 = vshrl.u32 %v414, 7
    %v416 = vsub.s32 0, %v415
    %v417 = vrot.slane %v412, %v416
    %v451 = vunpack.c.l.b16 %v380
    %v452 = vunpack.c.l.b16 %v381
    %v453 = vunpack.c.l.b16 %v382
    %v454 = vunpack.c.l.b16 %v383
    %v455 = vunpack.c.l.b16 %v384
    %v456 = vunpack.c.l.b16 %v385
    %v457 = vunpack.c.l.b16 %v386
    %v458 = vunpack.c.l.b16 %v387
    %v459 = vunpack.c.l.b16 %v388
    %v460 = vunpack.c.l.b16 %v389
    %v461 = vunpack.c.l.b16 %v390
    %v462 = vunpack.c.l.b16 %v391
    %v463 = vunpack.c.l.b16 %v392
    %v464 = vunpack.c.l.b16 %v393
    %v465 = vunpack.c.l.b16 %v394
    %v466 = vunpack.c.l.b16 %v395
    %v467 = vunpack.c.l.b16 %v396
    %v468 = vunpack.c.l.b16 %v397
    %v469 = vunpack.c.l.b16 %v398
    %v470 = vunpack.c.l.b16 %v399
    %v471 = vunpack.c.l.b16 %v400
    %v472 = vunpack.c.l.b16 %v401
    %v473 = vunpack.c.l.b16 %v402
    %v474 = vunpack.c.l.b16 %v403
    %v475 = vunpack.c.l.b16 %v404
    %v476 = vunpack.c.l.b16 %v405
    %v477 = vunpack.c.l.b16 %v406
    %v478 = vunpack.c.l.b16 %v407
    %v479 = vunpack.c.l.b16 %v408
    %v480 = vunpack.c.l.b16 %v409
    %v481 = vunpack.c.l.b16 %v410
    %v482 = vunpack.c.l.b16 %v411
    %v483 = vpack.c.b16 %v452, %v451
    %v484 = vpack.c.b16 %v454, %v453
    %v485 = vpack.c.b16 %v456, %v455
    %v486 = vpack.c.b16 %v458, %v457
    %v487 = vpack.c.b16 %v460, %v459
    %v488 = vpack.c.b16 %v462, %v461
    %v489 = vpack.c.b16 %v464, %v463
    %v490 = vpack.c.b16 %v466, %v465
    %v491 = vpack.c.b16 %v468, %v467
    %v492 = vpack.c.b16 %v470, %v469
    %v493 = vpack.c.b16 %v472, %v471
    %v494 = vpack.c.b16 %v474, %v473
    %v495 = vpack.c.b16 %v476, %v475
    %v496 = vpack.c.b16 %v478, %v477
    %v497 = vpack.c.b16 %v480, %v479
    %v498 = vpack.c.b16 %v482, %v481
    %515 = vmatprep.subr.bf16.mxu0 0
    %516 = vmatpush1.bf16.msra.mxu0 %v490
    %517 = vmatprep.subr.bf16.mxu0 0
    %518 = vmatpush1.bf16.msra.mxu0 %v489
    %519 = vmatprep.subr.bf16.mxu0 0
    %520 = vmatpush1.bf16.msra.mxu0 %v488
    %521 = vmatprep.subr.bf16.mxu0 0
    %522 = vmatpush1.bf16.msra.mxu0 %v487
    %523 = vmatprep.subr.bf16.mxu0 0
    %524 = vmatpush1.bf16.msra.mxu0 %v486
    %525 = vmatprep.subr.bf16.mxu0 0
    %526 = vmatpush1.bf16.msra.mxu0 %v485
    %527 = vmatprep.subr.bf16.mxu0 0
    %528 = vmatpush1.bf16.msra.mxu0 %v484
    %529 = vmatprep.subr.bf16.mxu0 0
    %530 = vmatpush1.bf16.msra.mxu0 %v483
    %531 = vmatprep.subr.bf16.mxu0 0
    %532 = vmatpush2.bf16.msra.mxu0 %v498
    %533 = vmatprep.subr.bf16.mxu0 0
    %534 = vmatpush2.bf16.msra.mxu0 %v497
    %535 = vmatprep.subr.bf16.mxu0 0
    %536 = vmatpush2.bf16.msra.mxu0 %v496
    %537 = vmatprep.subr.bf16.mxu0 0
    %538 = vmatpush2.bf16.msra.mxu0 %v495
    %539 = vmatprep.subr.bf16.mxu0 0
    %540 = vmatpush2.bf16.msra.mxu0 %v494
    %541 = vmatprep.subr.bf16.mxu0 0
    %542 = vmatpush2.bf16.msra.mxu0 %v493
    %543 = vmatprep.subr.bf16.mxu0 0
    %544 = vmatpush2.bf16.msra.mxu0 %v492
    %545 = vmatprep.subr.bf16.mxu0 0
    %546 = vmatpush2.bf16.msra.mxu0 %v491
    %547 = vmatprep.mubr.bf16.mxu0 %v379
    %548 = vmatmul.mubr.bf16.gmra.mxu0 %v378
    %v549 = vpop.f32.mrf.mxu0
    %v550 = vadd.f32 %v417, %v549
    %v551 = vpop.f32.mrf.mxu0
    %v552 = vpop.f32.mrf.mxu0
    %v553 = vpop.f32.mrf.mxu0
    %554 = vdwg.mxu0
    %vm555 = vcmask 7168
    %556 = vst.msk [vmem:[%s7] sm:$0xff] %vm555, %v550
    // Predicated region
    $region34: #{critic_forward.1} parent=1 // pred_check
      _
    $region35: #{critic_forward.1} parent=1 // pred_check_branch
      %558 = sbr.rel (0) target = $region37
    $region36: #{critic_forward.1} parent=1 // pred_region
      _
    $region37: #{critic_forward.1} parent=1 // pred_fallthru
      _
    // Predicated region
    $region38: #{critic_forward.1} parent=1 // pred_check
      _
    $region39: #{critic_forward.1} parent=1 // pred_check_branch
      %560 = sbr.rel (0) target = $region41
    $region40: #{critic_forward.1} parent=1 // pred_region
      _
    $region41: #{critic_forward.1} parent=1 // pred_fallthru
      _
    %561 = vsyncpa [#allocation4], 1

</llo_original>
